<compile_context>
chip_gen: v5e
topology: v5e:2x2
jax: 0.10.0
libtpu: 0.0.40
codegen_flags: <defaults>
</compile_context>

<pallas_src>
import functools
import math

import jax
import jax.numpy as jnp
from jax.experimental import pallas as pl
from jax.experimental.pallas import tpu as pltpu


def _cdiv(a: int, b: int) -> int:
    return (a + b - 1) // b


def _round_up(a: int, b: int) -> int:
    return _cdiv(a, b) * b


_BLOCK_BUDGET_BYTES = 6 * 1024 * 1024     # per output buffer (Pallas double-buffers it)
_SPLIT_THRESHOLD_BYTES = 2 * 1024 * 1024  # only force a >=2-block grid (megacore) above this


def _pe_kernel(freq_ref, bias_ref, o_ref, *, fold: int, tile_r: int):
    # o_ref: (tile_r, kd) block of the folded PE table.
    # Folded row r, flat column c  <->  position = r*fold + c // d_model,
    #                                   column   = c %  d_model.
    # angle[r, c] = (base_pos + r*fold) * freq[c] + col_bias[c]
    #   freq[c]     = exp(-2*(c%d_model // 2) * ln(10000)/d_model)
    #   col_bias[c] = (c // d_model) * freq[c] + (pi/2 if (c%d_model) odd else 0)
    # => 1 mul + 1 add per element, single sin (cos == sin(x + pi/2)).
    base_pos = pl.program_id(0) * (tile_r * fold)
    row = jax.lax.broadcasted_iota(jnp.int32, (tile_r, 1), 0)
    pos_row = (row * fold + base_pos).astype(jnp.float32)          # (tile_r, 1)
    o_ref[...] = jnp.sin(pos_row * freq_ref[...] + bias_ref[...])  # bcast (1, kd)


@functools.lru_cache(maxsize=64)
def _pe_table(seq_len: int, d_model: int) -> jax.Array:
    """Builds pe[:seq_len] of shape (1, seq_len, d_model), float32 (memoized)."""
    # Fold factor so the lane (last) dim of the kernel output is a multiple of 128.
    fold = 128 // math.gcd(d_model, 128)
    kd = fold * d_model
    rows_total = _cdiv(seq_len, fold)          # folded rows actually needed

    # Byte-budget tile sizing: keep each output block <= ~6 MiB (so <= ~12 MiB
    # double-buffered), rows aligned to the 8-sublane granule, capped at 1024 rows.
    row_bytes = kd * 4
    tile_r = max(8, min(1024, _BLOCK_BUDGET_BYTES // row_bytes))
    tile_r = _round_up(tile_r, 8)
    tile_r = min(tile_r, _round_up(rows_total, 8))
    num_blocks = _cdiv(rows_total, tile_r)

    # Only force a 2-block split (for v7x dual TensorCores) when there is enough
    # work that it matters; on small tables a single block avoids grid overhead.
    total_bytes = rows_total * row_bytes
    if num_blocks == 1 and rows_total > 8 and total_bytes > _SPLIT_THRESHOLD_BYTES:
        tile_r = _round_up(_cdiv(rows_total, 2), 8)
        num_blocks = _cdiv(rows_total, tile_r)

    # Column-only terms, hoisted out of the kernel (computed once).
    cf = jnp.arange(kd, dtype=jnp.int32)                         # flat column index
    col = cf % d_model                                           # original column
    freq = jnp.exp(
        (col // 2).astype(jnp.float32)
        * jnp.float32(-2.0 * math.log(10000.0) / d_model)
    )
    phase = (col & 1).astype(jnp.float32) * jnp.float32(math.pi / 2.0)
    col_bias = (cf // d_model).astype(jnp.float32) * freq + phase
    freq_row = freq.reshape(1, kd).astype(jnp.float32)
    bias_row = col_bias.reshape(1, kd).astype(jnp.float32)

    kernel = functools.partial(_pe_kernel, fold=fold, tile_r=tile_r)
    pe_folded = pl.pallas_call(
        kernel,
        out_shape=jax.ShapeDtypeStruct((rows_total, kd), jnp.float32),
        grid_spec=pltpu.PrefetchScalarGridSpec(
            num_scalar_prefetch=0,
            grid=(num_blocks,),
            in_specs=[
                pl.BlockSpec((1, kd), lambda i: (0, 0)),   # freq row (resident)
                pl.BlockSpec((1, kd), lambda i: (0, 0)),   # col_bias row (resident)
            ],
            out_specs=pl.BlockSpec((tile_r, kd), lambda i: (i, 0)),
        ),
        compiler_params=pltpu.CompilerParams(
            dimension_semantics=("parallel",)
        ),
    )(freq_row, bias_row)

    # Unfold to (positions, d_model); drops at most fold-1 trailing positions.
    pe = pe_folded.reshape(rows_total * fold, d_model)[:seq_len]
    return pe[None, :, :]


def positional_embedding(x: jax.Array, d_model: int, max_len: int = 5000) -> jax.Array:
    """Mirrors PositionalEmbedding.forward: returns pe[:, :x.shape[1]]."""
    seq_len = min(int(x.shape[1]), max_len)
    return _pe_table(seq_len, int(d_model))


def _reference_pe(seq_len: int, d_model: int) -> jnp.ndarray:
    """Pure-JAX reference mirroring the PyTorch buffer construction."""
    position = jnp.arange(seq_len, dtype=jnp.float32)[:, None]
    div_term = jnp.exp(
        jnp.arange(0, d_model, 2, dtype=jnp.float32)
        * (-(math.log(10000.0) / d_model))
    )
    pe = jnp.zeros((seq_len, d_model), dtype=jnp.float32)
    pe = pe.at[:, 0::2].set(jnp.sin(position * div_term))
    pe = pe.at[:, 1::2].set(jnp.cos(position * div_term))
    return pe[None, :, :]


if __name__ == "__main__":
    key = jax.random.PRNGKey(0)
    batch, seq_len, d_model = 2, 8, 32
    x = jax.random.normal(key, (batch, seq_len, d_model), dtype=jnp.float32)

    out = positional_embedding(x, d_model)
    out = jax.block_until_ready(out)

    ref = _reference_pe(seq_len, d_model)
    assert out.shape == (1, seq_len, d_model), out.shape
    assert out.dtype == jnp.float32, out.dtype
    assert jnp.allclose(out, ref, atol=1e-5, rtol=1e-5), "mismatch vs reference"

    print("KERNEL_OK")
</pallas_src>

<mosaic_0001>
module attributes {stable_mosaic.version = 11 : i64} {
  func.func @_pe_kernel(%arg0: i32, %arg1: memref<1x128xf32, #tpu.memory_space<vmem>>, %arg2: memref<1x128xf32, #tpu.memory_space<vmem>>, %arg3: memref<8x128xf32, #tpu.memory_space<vmem>>) attributes {dimension_semantics = [#tpu.dimension_semantics<parallel>], iteration_bounds = array<i64: 1>, scalar_prefetch = 0 : i64, scratch_operands = 0 : i64, tpu.core_type = #tpu.core_type<tc>, window_params = [{pipeline_mode = #tpu.pipeline_mode<synchronous>, transform_indices = @transform_0, window_bounds = array<i64: 1, 128>}, {pipeline_mode = #tpu.pipeline_mode<synchronous>, transform_indices = @transform_1, window_bounds = array<i64: 1, 128>}, {transform_indices = @transform_2, window_bounds = array<i64: 8, 128>}]} {
    %c32_i32 = arith.constant 32 : i32
    %0 = arith.muli %arg0, %c32_i32 : i32
    %1 = tpu.iota {dimensions = array<i32: 0>} : vector<8x1xi32>
    %c4_i32 = arith.constant 4 : i32
    %2 = vector.broadcast %c4_i32 : i32 to vector<8x1xi32>
    %3 = arith.muli %1, %2 : vector<8x1xi32>
    %4 = vector.broadcast %0 : i32 to vector<8x1xi32>
    %5 = arith.addi %3, %4 : vector<8x1xi32>
    %6 = arith.sitofp %5 : vector<8x1xi32> to vector<8x1xf32>
    %c0 = arith.constant 0 : index
    %c0_0 = arith.constant 0 : index
    %7 = vector.load %arg1[%c0, %c0_0] : memref<1x128xf32, #tpu.memory_space<vmem>>, vector<1x128xf32>
    %8 = vector.broadcast %6 : vector<8x1xf32> to vector<8x128xf32>
    %9 = vector.broadcast %7 : vector<1x128xf32> to vector<8x128xf32>
    %10 = arith.mulf %8, %9 : vector<8x128xf32>
    %c0_1 = arith.constant 0 : index
    %c0_2 = arith.constant 0 : index
    %11 = vector.load %arg2[%c0_1, %c0_2] : memref<1x128xf32, #tpu.memory_space<vmem>>, vector<1x128xf32>
    %12 = vector.broadcast %11 : vector<1x128xf32> to vector<8x128xf32>
    %13 = arith.addf %10, %12 : vector<8x128xf32>
    %14 = math.sin %13 : vector<8x128xf32>
    %c0_3 = arith.constant 0 : index
    %c0_4 = arith.constant 0 : index
    %15 = vector.load %arg3[%c0_3, %c0_4] : memref<8x128xf32, #tpu.memory_space<vmem>>, vector<8x128xf32>
    tpu.vector_store %arg3[%c0_3, %c0_4], %14 {strides = array<i32>} : memref<8x128xf32, #tpu.memory_space<vmem>>, vector<8x128xf32>,
    return
  }
  func.func @transform_0(%arg0: i32) -> (i32, i32) {
    %c0_i32 = arith.constant 0 : i32
    %c0_i32_0 = arith.constant 0 : i32
    %c0_i32_1 = arith.constant 0 : i32
    return %c0_i32, %c0_i32_0 : i32, i32
  }
  func.func @transform_1(%arg0: i32) -> (i32, i32) {
    %c0_i32 = arith.constant 0 : i32
    %c0_i32_0 = arith.constant 0 : i32
    %c0_i32_1 = arith.constant 0 : i32
    return %c0_i32, %c0_i32_0 : i32, i32
  }
  func.func @transform_2(%arg0: i32) -> (i32, i32) {
    %c0_i32 = arith.constant 0 : i32
    %c0_i32_0 = arith.constant 0 : i32
    return %arg0, %c0_i32 : i32, i32
  }
}

</mosaic_0001>

<llo_original>
// kernel: tpu_custom_call.1
$region0: #{tpu_custom_call.1}
  #allocation0 [shape = 'u32[]', space=smem, size = 0x4, offset = 0x4, fixed_abs, tag = 'smem constant byte address 0x4 - core index']
  #allocation1 [shape = 'u32[72,128]{1,0:T(1,128)}', space=vmem, size = 0x9000, scoped, tag = 'internal scratch']
  %s0 = inlined_call_operand.hbm [shape: f32[1,128], index: 0, kind: input, shape index: {}]
  %s1 = inlined_call_operand.hbm [shape: f32[1,128], index: 1, kind: input, shape index: {}]
  %s2 = inlined_call_operand.hbm [shape: f32[2,128], index: 2, kind: output, shape index: {}]
  %s3 = sld [smem:[#allocation0]]
  $region26: #{tpu_custom_call.1} parent=0
    _
  %s5 = ssub.s32 1, %s3
  %s6 = scalar_select 0, %s5, %s3
  $region1: #{tpu_custom_call.1} parent=0
    #allocation2 [shape = 'u8[512]{0}', space=vmem, size = 0x400, scoped, tag = 'input window, operand 0, single buffered']
    #allocation3 [shape = 's32[1]{0}', space=sflag, size = 0x4, scoped, tag = 'scoped memory for tpu_custom_call.1']
    #allocation4 [shape = 's32[1]{0}', space=sflag, size = 0x4, scoped, tag = 'scoped memory for tpu_custom_call.1']
    #allocation5 [shape = 'u8[512]{0}', space=vmem, size = 0x400, scoped, tag = 'input window, operand 1, single buffered']
    #allocation6 [shape = 's32[1]{0}', space=sflag, size = 0x4, scoped, tag = 'scoped memory for tpu_custom_call.1']
    #allocation7 [shape = 'u8[4096]{0}', space=vmem, size = 0x1000, scoped, tag = 'output window, operand 0, single buffered']
    %7 = vsyncpa [#allocation3], 0
    %8 = vsyncpa [#allocation6], 0
    %9 = vsyncpa [#allocation4], 0
    // Predicated region
    $region2: #{tpu_custom_call.1} parent=1 // pred_check
      _
    $region3: #{tpu_custom_call.1} parent=1 // pred_check_branch
      %11 = sbr.rel (0) target = $region5
    $region4: #{tpu_custom_call.1} parent=1 // pred_region
      %13 = vsyncadd [#allocation3], 0
      %s15 = sshll.u32 %s0, 4
      %s16 = int_to_ptr.hbm [resolvable:$true] %s15
      %s17 = sshll.u32 [#allocation2], 4
      %s18 = int_to_ptr.vmem [resolvable:$true] %s17
      %20 = dma.hbm_to_vmem [thread:$0]  %s16, 16, %s18, [#allocation3]
    $region5: #{tpu_custom_call.1} parent=1 // pred_fallthru
      _
    // Predicated region
    $region6: #{tpu_custom_call.1} parent=1 // pred_check
      _
    $region7: #{tpu_custom_call.1} parent=1 // pred_check_branch
      %22 = sbr.rel (0) target = $region9
    $region8: #{tpu_custom_call.1} parent=1 // pred_region
      %24 = vsyncadd [#allocation6], 0
      %s26 = sshll.u32 %s1, 4
      %s27 = int_to_ptr.hbm [resolvable:$true] %s26
      %s28 = sshll.u32 [#allocation5], 4
      %s29 = int_to_ptr.vmem [resolvable:$true] %s28
      %31 = dma.hbm_to_vmem [thread:$0]  %s27, 16, %s29, [#allocation6]
    $region9: #{tpu_custom_call.1} parent=1 // pred_fallthru
      _
    // Predicated region
    $region10: #{tpu_custom_call.1} parent=1 // pred_check
      _
    $region11: #{tpu_custom_call.1} parent=1 // pred_check_branch
      %33 = sbr.rel (0) target = $region13
    $region12: #{tpu_custom_call.1} parent=1 // pred_region
      %35 = dma.done [#allocation3], 16
    $region13: #{tpu_custom_call.1} parent=1 // pred_fallthru
      _
    // Predicated region
    $region14: #{tpu_custom_call.1} parent=1 // pred_check
      _
    $region15: #{tpu_custom_call.1} parent=1 // pred_check_branch
      %37 = sbr.rel (0) target = $region17
    $region16: #{tpu_custom_call.1} parent=1 // pred_region
      %39 = dma.done [#allocation6], 16
    $region17: #{tpu_custom_call.1} parent=1 // pred_fallthru
      _
    %s40 = smul.u32 0, 32
    %v41 = vlaneseq
    %v42 = vshrl.u32 %v41, 7
    %v43 = vmul.u32 %v42, 4
    %v44 = vstv %s40
    %v45 = vadd.s32 %v43, %v44
    %v46 = vcvt.s32.f32 %v45
    %v47 = vld [vmem:[#allocation2] sm:$0x1]
    %v49 = vperm.slane %v47, 0
    %v51 = vmul.f32 %v46, %v49
    %v52 = vld [vmem:[#allocation5] sm:$0x1]
    %v54 = vperm.slane %v52, 0
    %v56 = vadd.f32 %v51, %v54
    %v57 = vand.u32 2147483647, %v56
    %vm58 = vcmp.le.f32.partialorder %v57, 0.7853982
    %vm59 = vcmp.lt.s32.totalorder %v56, 0
    %v60 = vand.u32 %v56, 2139095040
    %v61 = vshrl.u32 %v60, 23
    %v62 = vsub.s32 %v61, 127
    %v63 = vand.u32 2147483647, %v56
    %v64 = vand.u32 %v63, 8388607
    %v65 = vor.u32 %v64, 8388608
    %v66 = vsub.s32 0, %v65
    %v67 = vadd.s32 %v62, 1
    %vm68 = vcmp.gt.s32.totalorder %v67, 0
    %v69 = vsel %vm68, %v67, 0
    %v70 = vshrl.u32 %v69, 5
    %v71 = vand.u32 %v69, 31
    %v72 = vsub.s32 32, %v71
    %v73 = vshrl.u32 683565275, %v72
    %v74 = vshll.u32 683565275, %v71
    %v75 = vshrl.u32 2475754826, %v72
    %v76 = vor.u32 %v74, %v75
    %v77 = vshll.u32 2475754826, %v71
    %v78 = vshrl.u32 2131351028, %v72
    %v79 = vor.u32 %v77, %v78
    %v80 = vshll.u32 2131351028, %v71
    %v81 = vshrl.u32 2102212464, %v72
    %v82 = vor.u32 %v80, %v81
    %v83 = vshll.u32 2102212464, %v71
    %v84 = vshrl.u32 920167782, %v72
    %v85 = vor.u32 %v83, %v84
    %v86 = vshll.u32 920167782, %v71
    %v87 = vshrl.u32 1326507024, %v72
    %v88 = vor.u32 %v86, %v87
    %vm89 = vcmp.lt.s32.totalorder %v70, 1
    %vm90 = vcmp.lt.s32.totalorder %v70, 2
    %vm91 = vcmp.lt.s32.totalorder %v70, 3
    %vm92 = vcmp.lt.s32.totalorder %v70, 4
    %v93 = vsel %vm89, %v73, %v76
    %v94 = vsel %vm92, %v82, 2102212464
    %v95 = vsel %vm91, %v79, %v94
    %v96 = vsel %vm90, %v93, %v95
    %v97 = vsel %vm89, %v76, %v79
    %v98 = vsel %vm92, %v85, 920167782
    %v99 = vsel %vm91, %v82, %v98
    %v100 = vsel %vm90, %v97, %v99
    %v101 = vsel %vm89, %v79, %v82
    %v102 = vsel %vm92, %v88, 1326507024
    %v103 = vsel %vm91, %v85, %v102
    %v104 = vsel %vm90, %v101, %v103
    %v105 = vshll.u32 %v65, 8
    %v106 = vand.u32 %v105, 65535
    %v107 = vshrl.u32 %v105, 16
    %v108 = vand.u32 %v104, 65535
    %v109 = vshrl.u32 %v104, 16
    %v110 = vmul.u32 %v106, %v108
    %v111 = vmul.u32 %v106, %v109
    %v112 = vmul.u32 %v107, %v108
    %v113 = vmul.u32 %v107, %v109
    %v114 = vshll.u32 %v111, 16
    %v115 = vshrl.u32 %v111, 16
    %v116 = vshll.u32 %v112, 16
    %v117 = vshrl.u32 %v112, 16
    %vm118 = vc.u32 %v110, %v114
    %v119 = vsel %vm118, 1, 0
    %v120 = vadd.s32 %v110, %v114
    %v121 = vadd.s32 %v113, %v119
    %vm122 = vc.u32 %v120, %v116
    %v123 = vsel %vm122, 1, 0
    %v124 = vadd.s32 %v120, %v116
    %v125 = vadd.s32 %v121, %v123
    %v126 = vadd.s32 %v125, %v115
    %v127 = vadd.s32 %v126, %v117
    %v128 = vand.u32 %v105, 65535
    %v129 = vshrl.u32 %v105, 16
    %v130 = vand.u32 %v100, 65535
    %v131 = vshrl.u32 %v100, 16
    %v132 = vmul.u32 %v128, %v130
    %v133 = vmul.u32 %v128, %v131
    %v134 = vmul.u32 %v129, %v130
    %v135 = vmul.u32 %v129, %v131
    %v136 = vshll.u32 %v133, 16
    %v137 = vshrl.u32 %v133, 16
    %v138 = vshll.u32 %v134, 16
    %v139 = vshrl.u32 %v134, 16
    %vm140 = vc.u32 %v132, %v136
    %v141 = vsel %vm140, 1, 0
    %v142 = vadd.s32 %v132, %v136
    %v143 = vadd.s32 %v135, %v141
    %vm144 = vc.u32 %v142, %v138
    %v145 = vsel %vm144, 1, 0
    %v146 = vadd.s32 %v142, %v138
    %v147 = vadd.s32 %v143, %v145
    %v148 = vadd.s32 %v147, %v137
    %v149 = vadd.s32 %v148, %v139
    %v150 = vmul.u32 %v105, %v96
    %v151 = vadd.s32 %v127, %v146
    %vm152 = vc.u32 %v127, %v146
    %v153 = vadd.s32 %v149, 1
    %v154 = vsel %vm152, %v153, %v149
    %v155 = vadd.s32 %v150, %v154
    %v156 = vadd.s32 %v155, 536870912
    %v157 = vshrl.u32 %v156, 30
    %v158 = vshll.u32 %v157, 30
    %v159 = vsub.s32 %v155, %v158
    %vm160 = vcmp.lt.s32.totalorder %v159, 0
    %v161 = vsub.s32 0, %v159
    %v162 = vsel %vm160, %v161, %v159
    %v163 = vclz %v162
    %v164 = vsub.s32 %v163, 2
    %vm165 = vcmp.gt.s32.totalorder 0, %v164
    %v166 = vsel %vm165, 0, %v164
    %v167 = vsub.s32 32, %v166
    %v168 = vshll.u32 %v159, %v166
    %v169 = vshrl.u32 %v151, %v167
    %v170 = vor.u32 %v168, %v169
    %v171 = vsub.s32 4294967266, %v166
    %v172 = vadd.s32 %v171, 127
    %v173 = vshll.u32 %v172, 23
    %v174 = vor.u32 4788187, %v173
    %v175 = vand.u32 2147483647, %v174
    %v177 = vcvt.s32.f32 %v170
    %v178 = vmul.f32 %v177, %v175
    %v179 = vxor.u32 %v178, 2147483648
    %v180 = vsel %vm59, %v179, %v178
    %v181 = vsub.s32 4, %v157
    %v182 = vsel %vm59, %v181, %v157
    %v183 = vsel %vm58, %v56, %v180
    %v184 = vsel %vm58, 0, %v182
    %v185 = vmul.f32 %v183, %v183
    %v186 = vmul.f32 %v185, -0.001358992
    %v187 = vadd.f32 %v186, 0.041655596
    %v188 = vmul.f32 %v185, %v187
    %v189 = vadd.f32 %v188, -0.4999988
    %v190 = vmul.f32 %v185, %v189
    %v191 = vadd.f32 1.0, %v190
    %v192 = vmul.f32 %v183, %v183
    %v193 = vmul.f32 %v192, -0.00019511016
    %v194 = vadd.f32 %v193, 0.008332121
    %v195 = vmul.f32 %v192, %v194
    %v196 = vadd.f32 %v195, -0.16666654
    %v197 = vmul.f32 %v192, %v196
    %v198 = vadd.f32 %v197, 1.0
    %v199 = vmul.f32 %v198, %v183
    %vm200 = vweird.f32 %v56
    %v201 = vadd.s32 %v184, 3
    %v202 = vand.u32 %v201, 3
    %vm203 = vcmp.lt.s32.totalorder %v202, 2
    %vm204 = vcmp.eq.s32.totalorder %v202, 0
    %v205 = vxor.u32 %v199, 2147483648
    %v206 = vsel %vm204, %v191, %v205
    %vm207 = vcmp.eq.s32.totalorder %v202, 2
    %v208 = vxor.u32 %v191, 2147483648
    %v209 = vsel %vm207, %v208, %v199
    %v210 = vsel %vm203, %v206, %v209
    %v211 = vsel %vm200, nan, %v210
    %212 = vst [vmem:[#allocation7] sm:$0xff] %v211
    // Predicated region
    $region18: #{tpu_custom_call.1} parent=1 // pred_check
      _
    $region19: #{tpu_custom_call.1} parent=1 // pred_check_branch
      %214 = sbr.rel (0) target = $region21
    $region20: #{tpu_custom_call.1} parent=1 // pred_region
      %216 = vsyncadd [#allocation4], 96
      %s217 = sshll.u32 [#allocation7], 4
      %s218 = int_to_ptr.vmem [resolvable:$true] %s217
      %s219 = sshll.u32 %s2, 4
      %s220 = int_to_ptr.hbm [resolvable:$true] %s219
      %225 = dma.vmem_to_hbm [thread:$0]  %s218, 32, %s220, [#allocation4], 32, 32, 2
    $region21: #{tpu_custom_call.1} parent=1 // pred_fallthru
      _
    // Predicated region
    $region22: #{tpu_custom_call.1} parent=1 // pred_check
      _
    $region23: #{tpu_custom_call.1} parent=1 // pred_check_branch
      %227 = sbr.rel (0) target = $region25
    $region24: #{tpu_custom_call.1} parent=1 // pred_region
      %229 = dma.done [#allocation4], 128
    $region25: #{tpu_custom_call.1} parent=1 // pred_fallthru
      _
    %230 = vsyncpa [#allocation3], 1
    %231 = vsyncpa [#allocation6], 1
    %232 = vsyncpa [#allocation4], 1

</llo_original>
